<compile_context>
chip_gen: v5e
topology: v5e:2x2
jax: 0.10.0
libtpu: 0.0.40
codegen_flags: <defaults>
</compile_context>

<pallas_src>
import functools

import jax
import jax.numpy as jnp
import numpy as np
from jax.experimental import pallas as pl
from jax.experimental.pallas import tpu as pltpu


# ----------------------------------------------------------------------------- #
# Fused single-stage kernel
# ----------------------------------------------------------------------------- #
def _stage_kernel(x_ref, m_ref, w_in_ref, b_in_ref, wd_ref, bd_ref,
                  w1_ref, b1_ref, w_out_ref, b_out_ref, o_ref,
                  *, dilations, t_actual):
    """One batch element: conv_1x1 -> L dilated residual layers -> conv_out*mask.

    Shapes seen by the kernel:
      x_ref     (1, Cin, Tp)    f32
      m_ref     (1, 1,   Tp)    f32   (zero on the lane-padding tail)
      w_in_ref  (C, Cin)        bf16
      b_in_ref  (C, 1)          f32
      wd_ref    (L, C, 3C)      bf16  (taps [t-d | t | t+d] stacked along Cin)
      bd_ref    (L, C, 1)       f32
      w1_ref    (L, C, C)       bf16
      b1_ref    (L, C, 1)       f32
      w_out_ref (K, C)          bf16
      b_out_ref (K, 1)          f32
      o_ref     (1, K, Tp)      f32
    """
    x = x_ref[0]                                     # (Cin, Tp)
    m = m_ref[0]                                     # (1,  Tp)
    Tp = x.shape[-1]
    lane = jax.lax.broadcasted_iota(jnp.int32, (1, Tp), 1)

    # Input 1x1 conv: (C, Cin) @ (Cin, Tp) on the MXU, bf16 in / f32 accumulate.
    cur = jnp.dot(w_in_ref[...], x.astype(jnp.bfloat16),
                  preferred_element_type=jnp.float32) + b_in_ref[...]
    # Zero the lane-padding tail so dilated taps read exact zeros there
    # (matches Conv1d's zero padding of the original, un-padded sequence).
    cur = jnp.where(lane < t_actual, cur, 0.0)

    for i, d in enumerate(dilations):
        # Taps via XLU lane rotation + iota edge masks (no HBM pad copies).
        left = pltpu.roll(cur, d, axis=1)            # left[t]  = cur[t - d]
        left = jnp.where(lane >= d, left, 0.0)
        right = pltpu.roll(cur, Tp - d, axis=1)      # right[t] = cur[t + d]
        right = jnp.where(lane < t_actual - d, right, 0.0)
        rhs = jnp.concatenate([left, cur, right], axis=0).astype(jnp.bfloat16)

        # 3-tap dilated conv collapsed into one (C, 3C) @ (3C, Tp) matmul.
        h = jnp.dot(wd_ref[i], rhs, preferred_element_type=jnp.float32) + bd_ref[i]
        h = jnp.maximum(h, 0.0)                      # ReLU
        out = jnp.dot(w1_ref[i], h.astype(jnp.bfloat16),
                      preferred_element_type=jnp.float32) + b1_ref[i]
        # TODO(synk): nn.Dropout() treated as identity (inference / eval mode).
        cur = (cur + out) * m                        # residual + mask

    logits = jnp.dot(w_out_ref[...], cur.astype(jnp.bfloat16),
                     preferred_element_type=jnp.float32) + b_out_ref[...]
    o_ref[0] = (logits * m).astype(o_ref.dtype)


def single_stage_forward(prep, x, mask):
    """x: (B, dim, T) f32, mask: (B, num_classes, T) f32 -> (B, num_classes, T)."""
    B, Cin, T = x.shape
    C = prep["w1"].shape[1]
    K = prep["w_out"].shape[0]
    L = prep["wd"].shape[0]

    # Lane-dense T: pad to a multiple of 128 (mask tail padded with zeros).
    Tp = ((T + 127) // 128) * 128
    pad = Tp - T
    xpad = jnp.pad(x, ((0, 0), (0, 0), (0, pad)))
    m1 = jnp.pad(mask[:, 0:1, :], ((0, 0), (0, 0), (0, pad)))

    dilations = tuple(2 ** i for i in range(L))
    kernel = functools.partial(_stage_kernel, dilations=dilations, t_actual=T)

    out = pl.pallas_call(
        kernel,
        out_shape=jax.ShapeDtypeStruct((B, K, Tp), jnp.float32),
        grid=(B,),
        in_specs=[
            pl.BlockSpec((1, Cin, Tp), lambda i: (i, 0, 0)),       # x
            pl.BlockSpec((1, 1, Tp), lambda i: (i, 0, 0)),         # mask[:,0:1,:]
            pl.BlockSpec((C, Cin), lambda i: (0, 0)),              # w_in
            pl.BlockSpec((C, 1), lambda i: (0, 0)),                # b_in
            pl.BlockSpec((L, C, 3 * C), lambda i: (0, 0, 0)),      # wd (stacked taps)
            pl.BlockSpec((L, C, 1), lambda i: (0, 0, 0)),          # bd
            pl.BlockSpec((L, C, C), lambda i: (0, 0, 0)),          # w1
            pl.BlockSpec((L, C, 1), lambda i: (0, 0, 0)),          # b1
            pl.BlockSpec((K, C), lambda i: (0, 0)),                # w_out
            pl.BlockSpec((K, 1), lambda i: (0, 0)),                # b_out
        ],
        out_specs=pl.BlockSpec((1, K, Tp), lambda i: (i, 0, 0)),
        compiler_params=pltpu.CompilerParams(dimension_semantics=("parallel",)),
    )(xpad, m1, prep["w_in"], prep["b_in"], prep["wd"], prep["bd"],
      prep["w1"], prep["b1"], prep["w_out"], prep["b_out"])

    return out[:, :, :T]


# ----------------------------------------------------------------------------- #
# Parameter setup (torch Conv1d layouts) + kernel-friendly packing
# ----------------------------------------------------------------------------- #
def init_params(key, dim, num_f_maps, num_layers, num_classes, scale=0.2):
    keys = iter(jax.random.split(key, 4 + 4 * num_layers))
    p = {
        "w_in": scale * jax.random.normal(next(keys), (num_f_maps, dim), jnp.float32),
        "b_in": scale * jax.random.normal(next(keys), (num_f_maps,), jnp.float32),
        "layers": [],
        "w_out": scale * jax.random.normal(next(keys), (num_classes, num_f_maps), jnp.float32),
        "b_out": scale * jax.random.normal(next(keys), (num_classes,), jnp.float32),
    }
    for _ in range(num_layers):
        p["layers"].append({
            # torch Conv1d weight layout (Cout, Cin, K=3)
            "wd": scale * jax.random.normal(next(keys), (num_f_maps, num_f_maps, 3), jnp.float32),
            "bd": scale * jax.random.normal(next(keys), (num_f_maps,), jnp.float32),
            "w1": scale * jax.random.normal(next(keys), (num_f_maps, num_f_maps), jnp.float32),
            "b1": scale * jax.random.normal(next(keys), (num_f_maps,), jnp.float32),
        })
    return p


def prepare_params(p):
    """Stack per-layer weights, fold the 3 conv taps into the Cin axis, cast to bf16."""
    L = len(p["layers"])
    C = p["w_in"].shape[0]
    wd = jnp.stack([lp["wd"] for lp in p["layers"]])                  # (L, C, C, 3)
    wd_flat = jnp.transpose(wd, (0, 1, 3, 2)).reshape(L, C, 3 * C)    # [k=0|k=1|k=2]
    return {
        "w_in": p["w_in"].astype(jnp.bfloat16),
        "b_in": p["b_in"].reshape(-1, 1).astype(jnp.float32),
        "wd": wd_flat.astype(jnp.bfloat16),
        "bd": jnp.stack([lp["bd"] for lp in p["layers"]]).reshape(L, C, 1).astype(jnp.float32),
        "w1": jnp.stack([lp["w1"] for lp in p["layers"]]).astype(jnp.bfloat16),
        "b1": jnp.stack([lp["b1"] for lp in p["layers"]]).reshape(L, C, 1).astype(jnp.float32),
        "w_out": p["w_out"].astype(jnp.bfloat16),
        "b_out": p["b_out"].reshape(-1, 1).astype(jnp.float32),
    }


# ----------------------------------------------------------------------------- #
# Pure-JAX reference (same math / same bf16 matmul inputs, pad-based conv)
# ----------------------------------------------------------------------------- #
def _ref_forward(p, x, mask):
    L = p["wd"].shape[0]
    m1 = mask[:, 0:1, :]

    def mm(w, a):  # bf16 x bf16 matmul, f32 accumulation
        return jnp.einsum("oi,bit->bot", w, a.astype(jnp.bfloat16),
                          preferred_element_type=jnp.float32)

    cur = mm(p["w_in"], x) + p["b_in"][None]
    for i in range(L):
        d = 2 ** i
        T = cur.shape[-1]
        xp = jnp.pad(cur, ((0, 0), (0, 0), (d, d)))
        taps = jnp.concatenate(
            [xp[:, :, 0:T], xp[:, :, d:d + T], xp[:, :, 2 * d:2 * d + T]], axis=1)
        h = jnp.maximum(mm(p["wd"][i], taps) + p["bd"][i][None], 0.0)
        out = mm(p["w1"][i], h) + p["b1"][i][None]
        cur = (cur + out) * m1
    return (mm(p["w_out"], cur) + p["b_out"][None]) * m1


# ----------------------------------------------------------------------------- #
if __name__ == "__main__":
    num_layers = 4
    num_f_maps, dim, num_classes = 16, 6, 5
    B, T = 2, 64

    root = jax.random.PRNGKey(0)
    k_x, k_p = jax.random.split(root, 2)

    raw = init_params(k_p, dim, num_f_maps, num_layers, num_classes)
    prep = prepare_params(raw)

    x = jax.random.normal(k_x, (B, dim, T), jnp.float32)
    mask = jnp.ones((B, num_classes, T), jnp.float32)
    mask = mask.at[1, :, T - 12:].set(0.0)   # simulate a padded, shorter sequence

    fwd = jax.jit(single_stage_forward)
    out = jax.block_until_ready(fwd(prep, x, mask))
    assert out.shape == (B, num_classes, T), out.shape

    ref = _ref_forward(prep, x, mask)
    np.testing.assert_allclose(np.asarray(out), np.asarray(ref), rtol=1e-2, atol=1e-2)

    print("KERNEL_OK")
</pallas_src>

<mosaic_0001>
module attributes {stable_mosaic.version = 11 : i64} {
  func.func @_stage_kernel(%arg0: i32, %arg1: memref<1x6x128xf32, #tpu.memory_space<vmem>>, %arg2: memref<1x1x128xf32, #tpu.memory_space<vmem>>, %arg3: memref<16x6xbf16, #tpu.memory_space<vmem>>, %arg4: memref<16x1xf32, #tpu.memory_space<vmem>>, %arg5: memref<4x16x48xbf16, #tpu.memory_space<vmem>>, %arg6: memref<4x16x1xf32, #tpu.memory_space<vmem>>, %arg7: memref<4x16x16xbf16, #tpu.memory_space<vmem>>, %arg8: memref<4x16x1xf32, #tpu.memory_space<vmem>>, %arg9: memref<5x16xbf16, #tpu.memory_space<vmem>>, %arg10: memref<5x1xf32, #tpu.memory_space<vmem>>, %arg11: memref<1x5x128xf32, #tpu.memory_space<vmem>>) attributes {dimension_semantics = [#tpu.dimension_semantics<parallel>], iteration_bounds = array<i64: 2>, scalar_prefetch = 0 : i64, scratch_operands = 0 : i64, tpu.core_type = #tpu.core_type<tc>, window_params = [{transform_indices = @transform_0, window_bounds = array<i64: 1, 6, 128>}, {transform_indices = @transform_1, window_bounds = array<i64: 1, 1, 128>}, {pipeline_mode = #tpu.pipeline_mode<synchronous>, transform_indices = @transform_2, window_bounds = array<i64: 16, 6>}, {pipeline_mode = #tpu.pipeline_mode<synchronous>, transform_indices = @transform_3, window_bounds = array<i64: 16, 1>}, {pipeline_mode = #tpu.pipeline_mode<synchronous>, transform_indices = @transform_4, window_bounds = array<i64: 4, 16, 48>}, {pipeline_mode = #tpu.pipeline_mode<synchronous>, transform_indices = @transform_5, window_bounds = array<i64: 4, 16, 1>}, {pipeline_mode = #tpu.pipeline_mode<synchronous>, transform_indices = @transform_6, window_bounds = array<i64: 4, 16, 16>}, {pipeline_mode = #tpu.pipeline_mode<synchronous>, transform_indices = @transform_7, window_bounds = array<i64: 4, 16, 1>}, {pipeline_mode = #tpu.pipeline_mode<synchronous>, transform_indices = @transform_8, window_bounds = array<i64: 5, 16>}, {pipeline_mode = #tpu.pipeline_mode<synchronous>, transform_indices = @transform_9, window_bounds = array<i64: 5, 1>}, {transform_indices = @transform_10, window_bounds = array<i64: 1, 5, 128>}]} {
    %c0 = arith.constant 0 : index
    %c0_0 = arith.constant 0 : index
    %c0_1 = arith.constant 0 : index
    %0 = vector.load %arg1[%c0, %c0_0, %c0_1] : memref<1x6x128xf32, #tpu.memory_space<vmem>>, vector<1x6x128xf32>
    %1 = vector.shape_cast %0 : vector<1x6x128xf32> to vector<6x128xf32>
    %c0_2 = arith.constant 0 : index
    %c0_3 = arith.constant 0 : index
    %c0_4 = arith.constant 0 : index
    %2 = vector.load %arg2[%c0_2, %c0_3, %c0_4] : memref<1x1x128xf32, #tpu.memory_space<vmem>>, vector<1x1x128xf32>
    %3 = vector.shape_cast %2 : vector<1x1x128xf32> to vector<1x128xf32>
    %4 = tpu.iota {dimensions = array<i32: 1>} : vector<1x128xi32>
    %c0_5 = arith.constant 0 : index
    %c0_6 = arith.constant 0 : index
    %5 = vector.load %arg3[%c0_5, %c0_6] : memref<16x6xbf16, #tpu.memory_space<vmem>>, vector<16x6xbf16>
    %6 = arith.truncf %1 : vector<6x128xf32> to vector<6x128xbf16>
    %cst = arith.constant dense<0.000000e+00> : vector<16x128xf32>
    %7 = tpu.matmul %5, %6, %cst {dimension_numbers = #tpu.dot_dimension_numbers<[1], [0], [0], [1], [0, 0, 1, 1], [], []>} : vector<16x6xbf16>, vector<6x128xbf16>, vector<16x128xf32> -> vector<16x128xf32>
    %c0_7 = arith.constant 0 : index
    %c0_8 = arith.constant 0 : index
    %8 = vector.load %arg4[%c0_7, %c0_8] : memref<16x1xf32, #tpu.memory_space<vmem>>, vector<16x1xf32>
    %9 = vector.broadcast %8 : vector<16x1xf32> to vector<16x128xf32>
    %10 = arith.addf %7, %9 : vector<16x128xf32>
    %c64_i32 = arith.constant 64 : i32
    %11 = vector.broadcast %c64_i32 : i32 to vector<1x128xi32>
    %12 = arith.cmpi slt, %4, %11 : vector<1x128xi32>
    %cst_9 = arith.constant 0.000000e+00 : f32
    %13 = vector.shape_cast %12 : vector<1x128xi1> to vector<1x128xi1>
    %14 = vector.broadcast %13 : vector<1x128xi1> to vector<16x128xi1>
    %15 = vector.broadcast %cst_9 : f32 to vector<16x128xf32>
    %16 = arith.select %14, %10, %15 : vector<16x128xi1>, vector<16x128xf32>
    %c1_i32 = arith.constant 1 : i32
    %17 = tpu.dynamic_rotate %16 by %c1_i32 dim 1 : vector<16x128xf32>, i32 -> vector<16x128xf32>
    %c1_i32_10 = arith.constant 1 : i32
    %18 = vector.broadcast %c1_i32_10 : i32 to vector<1x128xi32>
    %19 = arith.cmpi sge, %4, %18 : vector<1x128xi32>
    %cst_11 = arith.constant 0.000000e+00 : f32
    %20 = vector.shape_cast %19 : vector<1x128xi1> to vector<1x128xi1>
    %21 = vector.broadcast %20 : vector<1x128xi1> to vector<16x128xi1>
    %22 = vector.broadcast %cst_11 : f32 to vector<16x128xf32>
    %23 = arith.select %21, %17, %22 : vector<16x128xi1>, vector<16x128xf32>
    %c127_i32 = arith.constant 127 : i32
    %24 = tpu.dynamic_rotate %16 by %c127_i32 dim 1 : vector<16x128xf32>, i32 -> vector<16x128xf32>
    %c63_i32 = arith.constant 63 : i32
    %25 = vector.broadcast %c63_i32 : i32 to vector<1x128xi32>
    %26 = arith.cmpi slt, %4, %25 : vector<1x128xi32>
    %cst_12 = arith.constant 0.000000e+00 : f32
    %27 = vector.shape_cast %26 : vector<1x128xi1> to vector<1x128xi1>
    %28 = vector.broadcast %27 : vector<1x128xi1> to vector<16x128xi1>
    %29 = vector.broadcast %cst_12 : f32 to vector<16x128xf32>
    %30 = arith.select %28, %24, %29 : vector<16x128xi1>, vector<16x128xf32>
    %31 = tpu.concatenate %23, %16, %30 in 0 : vector<16x128xf32>, vector<16x128xf32>, vector<16x128xf32> -> vector<48x128xf32>
    %32 = arith.truncf %31 : vector<48x128xf32> to vector<48x128xbf16>
    %c0_13 = arith.constant 0 : index
    %c0_14 = arith.constant 0 : index
    %c0_15 = arith.constant 0 : index
    %33 = vector.load %arg5[%c0_13, %c0_14, %c0_15] : memref<4x16x48xbf16, #tpu.memory_space<vmem>>, vector<1x16x48xbf16>
    %34 = vector.shape_cast %33 : vector<1x16x48xbf16> to vector<16x48xbf16>
    %cst_16 = arith.constant dense<0.000000e+00> : vector<16x128xf32>
    %35 = tpu.matmul %34, %32, %cst_16 {dimension_numbers = #tpu.dot_dimension_numbers<[1], [0], [0], [1], [0, 0, 1, 1], [], []>} : vector<16x48xbf16>, vector<48x128xbf16>, vector<16x128xf32> -> vector<16x128xf32>
    %c0_17 = arith.constant 0 : index
    %c0_18 = arith.constant 0 : index
    %c0_19 = arith.constant 0 : index
    %36 = vector.load %arg6[%c0_17, %c0_18, %c0_19] : memref<4x16x1xf32, #tpu.memory_space<vmem>>, vector<1x16x1xf32>
    %37 = vector.shape_cast %36 : vector<1x16x1xf32> to vector<16x1xf32>
    %38 = vector.broadcast %37 : vector<16x1xf32> to vector<16x128xf32>
    %39 = arith.addf %35, %38 : vector<16x128xf32>
    %cst_20 = arith.constant 0.000000e+00 : f32
    %40 = vector.broadcast %cst_20 : f32 to vector<16x128xf32>
    %41 = arith.maximumf %39, %40 : vector<16x128xf32>
    %c0_21 = arith.constant 0 : index
    %c0_22 = arith.constant 0 : index
    %c0_23 = arith.constant 0 : index
    %42 = vector.load %arg7[%c0_21, %c0_22, %c0_23] : memref<4x16x16xbf16, #tpu.memory_space<vmem>>, vector<1x16x16xbf16>
    %43 = vector.shape_cast %42 : vector<1x16x16xbf16> to vector<16x16xbf16>
    %44 = arith.truncf %41 : vector<16x128xf32> to vector<16x128xbf16>
    %cst_24 = arith.constant dense<0.000000e+00> : vector<16x128xf32>
    %45 = tpu.matmul %43, %44, %cst_24 {dimension_numbers = #tpu.dot_dimension_numbers<[1], [0], [0], [1], [0, 0, 1, 1], [], []>} : vector<16x16xbf16>, vector<16x128xbf16>, vector<16x128xf32> -> vector<16x128xf32>
    %c0_25 = arith.constant 0 : index
    %c0_26 = arith.constant 0 : index
    %c0_27 = arith.constant 0 : index
    %46 = vector.load %arg8[%c0_25, %c0_26, %c0_27] : memref<4x16x1xf32, #tpu.memory_space<vmem>>, vector<1x16x1xf32>
    %47 = vector.shape_cast %46 : vector<1x16x1xf32> to vector<16x1xf32>
    %48 = vector.broadcast %47 : vector<16x1xf32> to vector<16x128xf32>
    %49 = arith.addf %45, %48 : vector<16x128xf32>
    %50 = arith.addf %16, %49 : vector<16x128xf32>
    %51 = vector.broadcast %3 : vector<1x128xf32> to vector<16x128xf32>
    %52 = arith.mulf %50, %51 : vector<16x128xf32>
    %c2_i32 = arith.constant 2 : i32
    %53 = tpu.dynamic_rotate %52 by %c2_i32 dim 1 : vector<16x128xf32>, i32 -> vector<16x128xf32>
    %c2_i32_28 = arith.constant 2 : i32
    %54 = vector.broadcast %c2_i32_28 : i32 to vector<1x128xi32>
    %55 = arith.cmpi sge, %4, %54 : vector<1x128xi32>
    %cst_29 = arith.constant 0.000000e+00 : f32
    %56 = vector.shape_cast %55 : vector<1x128xi1> to vector<1x128xi1>
    %57 = vector.broadcast %56 : vector<1x128xi1> to vector<16x128xi1>
    %58 = vector.broadcast %cst_29 : f32 to vector<16x128xf32>
    %59 = arith.select %57, %53, %58 : vector<16x128xi1>, vector<16x128xf32>
    %c126_i32 = arith.constant 126 : i32
    %60 = tpu.dynamic_rotate %52 by %c126_i32 dim 1 : vector<16x128xf32>, i32 -> vector<16x128xf32>
    %c62_i32 = arith.constant 62 : i32
    %61 = vector.broadcast %c62_i32 : i32 to vector<1x128xi32>
    %62 = arith.cmpi slt, %4, %61 : vector<1x128xi32>
    %cst_30 = arith.constant 0.000000e+00 : f32
    %63 = vector.shape_cast %62 : vector<1x128xi1> to vector<1x128xi1>
    %64 = vector.broadcast %63 : vector<1x128xi1> to vector<16x128xi1>
    %65 = vector.broadcast %cst_30 : f32 to vector<16x128xf32>
    %66 = arith.select %64, %60, %65 : vector<16x128xi1>, vector<16x128xf32>
    %67 = tpu.concatenate %59, %52, %66 in 0 : vector<16x128xf32>, vector<16x128xf32>, vector<16x128xf32> -> vector<48x128xf32>
    %68 = arith.truncf %67 : vector<48x128xf32> to vector<48x128xbf16>
    %c1 = arith.constant 1 : index
    %c0_31 = arith.constant 0 : index
    %c0_32 = arith.constant 0 : index
    %69 = vector.load %arg5[%c1, %c0_31, %c0_32] : memref<4x16x48xbf16, #tpu.memory_space<vmem>>, vector<1x16x48xbf16>
    %70 = vector.shape_cast %69 : vector<1x16x48xbf16> to vector<16x48xbf16>
    %cst_33 = arith.constant dense<0.000000e+00> : vector<16x128xf32>
    %71 = tpu.matmul %70, %68, %cst_33 {dimension_numbers = #tpu.dot_dimension_numbers<[1], [0], [0], [1], [0, 0, 1, 1], [], []>} : vector<16x48xbf16>, vector<48x128xbf16>, vector<16x128xf32> -> vector<16x128xf32>
    %c1_34 = arith.constant 1 : index
    %c0_35 = arith.constant 0 : index
    %c0_36 = arith.constant 0 : index
    %72 = vector.load %arg6[%c1_34, %c0_35, %c0_36] : memref<4x16x1xf32, #tpu.memory_space<vmem>>, vector<1x16x1xf32>
    %73 = vector.shape_cast %72 : vector<1x16x1xf32> to vector<16x1xf32>
    %74 = vector.broadcast %73 : vector<16x1xf32> to vector<16x128xf32>
    %75 = arith.addf %71, %74 : vector<16x128xf32>
    %cst_37 = arith.constant 0.000000e+00 : f32
    %76 = vector.broadcast %cst_37 : f32 to vector<16x128xf32>
    %77 = arith.maximumf %75, %76 : vector<16x128xf32>
    %c1_38 = arith.constant 1 : index
    %c0_39 = arith.constant 0 : index
    %c0_40 = arith.constant 0 : index
    %78 = vector.load %arg7[%c1_38, %c0_39, %c0_40] : memref<4x16x16xbf16, #tpu.memory_space<vmem>>, vector<1x16x16xbf16>
    %79 = vector.shape_cast %78 : vector<1x16x16xbf16> to vector<16x16xbf16>
    %80 = arith.truncf %77 : vector<16x128xf32> to vector<16x128xbf16>
    %cst_41 = arith.constant dense<0.000000e+00> : vector<16x128xf32>
    %81 = tpu.matmul %79, %80, %cst_41 {dimension_numbers = #tpu.dot_dimension_numbers<[1], [0], [0], [1], [0, 0, 1, 1], [], []>} : vector<16x16xbf16>, vector<16x128xbf16>, vector<16x128xf32> -> vector<16x128xf32>
    %c1_42 = arith.constant 1 : index
    %c0_43 = arith.constant 0 : index
    %c0_44 = arith.constant 0 : index
    %82 = vector.load %arg8[%c1_42, %c0_43, %c0_44] : memref<4x16x1xf32, #tpu.memory_space<vmem>>, vector<1x16x1xf32>
    %83 = vector.shape_cast %82 : vector<1x16x1xf32> to vector<16x1xf32>
    %84 = vector.broadcast %83 : vector<16x1xf32> to vector<16x128xf32>
    %85 = arith.addf %81, %84 : vector<16x128xf32>
    %86 = arith.addf %52, %85 : vector<16x128xf32>
    %87 = vector.broadcast %3 : vector<1x128xf32> to vector<16x128xf32>
    %88 = arith.mulf %86, %87 : vector<16x128xf32>
    %c4_i32 = arith.constant 4 : i32
    %89 = tpu.dynamic_rotate %88 by %c4_i32 dim 1 : vector<16x128xf32>, i32 -> vector<16x128xf32>
    %c4_i32_45 = arith.constant 4 : i32
    %90 = vector.broadcast %c4_i32_45 : i32 to vector<1x128xi32>
    %91 = arith.cmpi sge, %4, %90 : vector<1x128xi32>
    %cst_46 = arith.constant 0.000000e+00 : f32
    %92 = vector.shape_cast %91 : vector<1x128xi1> to vector<1x128xi1>
    %93 = vector.broadcast %92 : vector<1x128xi1> to vector<16x128xi1>
    %94 = vector.broadcast %cst_46 : f32 to vector<16x128xf32>
    %95 = arith.select %93, %89, %94 : vector<16x128xi1>, vector<16x128xf32>
    %c124_i32 = arith.constant 124 : i32
    %96 = tpu.dynamic_rotate %88 by %c124_i32 dim 1 : vector<16x128xf32>, i32 -> vector<16x128xf32>
    %c60_i32 = arith.constant 60 : i32
    %97 = vector.broadcast %c60_i32 : i32 to vector<1x128xi32>
    %98 = arith.cmpi slt, %4, %97 : vector<1x128xi32>
    %cst_47 = arith.constant 0.000000e+00 : f32
    %99 = vector.shape_cast %98 : vector<1x128xi1> to vector<1x128xi1>
    %100 = vector.broadcast %99 : vector<1x128xi1> to vector<16x128xi1>
    %101 = vector.broadcast %cst_47 : f32 to vector<16x128xf32>
    %102 = arith.select %100, %96, %101 : vector<16x128xi1>, vector<16x128xf32>
    %103 = tpu.concatenate %95, %88, %102 in 0 : vector<16x128xf32>, vector<16x128xf32>, vector<16x128xf32> -> vector<48x128xf32>
    %104 = arith.truncf %103 : vector<48x128xf32> to vector<48x128xbf16>
    %c2 = arith.constant 2 : index
    %c0_48 = arith.constant 0 : index
    %c0_49 = arith.constant 0 : index
    %105 = vector.load %arg5[%c2, %c0_48, %c0_49] : memref<4x16x48xbf16, #tpu.memory_space<vmem>>, vector<1x16x48xbf16>
    %106 = vector.shape_cast %105 : vector<1x16x48xbf16> to vector<16x48xbf16>
    %cst_50 = arith.constant dense<0.000000e+00> : vector<16x128xf32>
    %107 = tpu.matmul %106, %104, %cst_50 {dimension_numbers = #tpu.dot_dimension_numbers<[1], [0], [0], [1], [0, 0, 1, 1], [], []>} : vector<16x48xbf16>, vector<48x128xbf16>, vector<16x128xf32> -> vector<16x128xf32>
    %c2_51 = arith.constant 2 : index
    %c0_52 = arith.constant 0 : index
    %c0_53 = arith.constant 0 : index
    %108 = vector.load %arg6[%c2_51, %c0_52, %c0_53] : memref<4x16x1xf32, #tpu.memory_space<vmem>>, vector<1x16x1xf32>
    %109 = vector.shape_cast %108 : vector<1x16x1xf32> to vector<16x1xf32>
    %110 = vector.broadcast %109 : vector<16x1xf32> to vector<16x128xf32>
    %111 = arith.addf %107, %110 : vector<16x128xf32>
    %cst_54 = arith.constant 0.000000e+00 : f32
    %112 = vector.broadcast %cst_54 : f32 to vector<16x128xf32>
    %113 = arith.maximumf %111, %112 : vector<16x128xf32>
    %c2_55 = arith.constant 2 : index
    %c0_56 = arith.constant 0 : index
    %c0_57 = arith.constant 0 : index
    %114 = vector.load %arg7[%c2_55, %c0_56, %c0_57] : memref<4x16x16xbf16, #tpu.memory_space<vmem>>, vector<1x16x16xbf16>
    %115 = vector.shape_cast %114 : vector<1x16x16xbf16> to vector<16x16xbf16>
    %116 = arith.truncf %113 : vector<16x128xf32> to vector<16x128xbf16>
    %cst_58 = arith.constant dense<0.000000e+00> : vector<16x128xf32>
    %117 = tpu.matmul %115, %116, %cst_58 {dimension_numbers = #tpu.dot_dimension_numbers<[1], [0], [0], [1], [0, 0, 1, 1], [], []>} : vector<16x16xbf16>, vector<16x128xbf16>, vector<16x128xf32> -> vector<16x128xf32>
    %c2_59 = arith.constant 2 : index
    %c0_60 = arith.constant 0 : index
    %c0_61 = arith.constant 0 : index
    %118 = vector.load %arg8[%c2_59, %c0_60, %c0_61] : memref<4x16x1xf32, #tpu.memory_space<vmem>>, vector<1x16x1xf32>
    %119 = vector.shape_cast %118 : vector<1x16x1xf32> to vector<16x1xf32>
    %120 = vector.broadcast %119 : vector<16x1xf32> to vector<16x128xf32>
    %121 = arith.addf %117, %120 : vector<16x128xf32>
    %122 = arith.addf %88, %121 : vector<16x128xf32>
    %123 = vector.broadcast %3 : vector<1x128xf32> to vector<16x128xf32>
    %124 = arith.mulf %122, %123 : vector<16x128xf32>
    %c8_i32 = arith.constant 8 : i32
    %125 = tpu.dynamic_rotate %124 by %c8_i32 dim 1 : vector<16x128xf32>, i32 -> vector<16x128xf32>
    %c8_i32_62 = arith.constant 8 : i32
    %126 = vector.broadcast %c8_i32_62 : i32 to vector<1x128xi32>
    %127 = arith.cmpi sge, %4, %126 : vector<1x128xi32>
    %cst_63 = arith.constant 0.000000e+00 : f32
    %128 = vector.shape_cast %127 : vector<1x128xi1> to vector<1x128xi1>
    %129 = vector.broadcast %128 : vector<1x128xi1> to vector<16x128xi1>
    %130 = vector.broadcast %cst_63 : f32 to vector<16x128xf32>
    %131 = arith.select %129, %125, %130 : vector<16x128xi1>, vector<16x128xf32>
    %c120_i32 = arith.constant 120 : i32
    %132 = tpu.dynamic_rotate %124 by %c120_i32 dim 1 : vector<16x128xf32>, i32 -> vector<16x128xf32>
    %c56_i32 = arith.constant 56 : i32
    %133 = vector.broadcast %c56_i32 : i32 to vector<1x128xi32>
    %134 = arith.cmpi slt, %4, %133 : vector<1x128xi32>
    %cst_64 = arith.constant 0.000000e+00 : f32
    %135 = vector.shape_cast %134 : vector<1x128xi1> to vector<1x128xi1>
    %136 = vector.broadcast %135 : vector<1x128xi1> to vector<16x128xi1>
    %137 = vector.broadcast %cst_64 : f32 to vector<16x128xf32>
    %138 = arith.select %136, %132, %137 : vector<16x128xi1>, vector<16x128xf32>
    %139 = tpu.concatenate %131, %124, %138 in 0 : vector<16x128xf32>, vector<16x128xf32>, vector<16x128xf32> -> vector<48x128xf32>
    %140 = arith.truncf %139 : vector<48x128xf32> to vector<48x128xbf16>
    %c3 = arith.constant 3 : index
    %c0_65 = arith.constant 0 : index
    %c0_66 = arith.constant 0 : index
    %141 = vector.load %arg5[%c3, %c0_65, %c0_66] : memref<4x16x48xbf16, #tpu.memory_space<vmem>>, vector<1x16x48xbf16>
    %142 = vector.shape_cast %141 : vector<1x16x48xbf16> to vector<16x48xbf16>
    %cst_67 = arith.constant dense<0.000000e+00> : vector<16x128xf32>
    %143 = tpu.matmul %142, %140, %cst_67 {dimension_numbers = #tpu.dot_dimension_numbers<[1], [0], [0], [1], [0, 0, 1, 1], [], []>} : vector<16x48xbf16>, vector<48x128xbf16>, vector<16x128xf32> -> vector<16x128xf32>
    %c3_68 = arith.constant 3 : index
    %c0_69 = arith.constant 0 : index
    %c0_70 = arith.constant 0 : index
    %144 = vector.load %arg6[%c3_68, %c0_69, %c0_70] : memref<4x16x1xf32, #tpu.memory_space<vmem>>, vector<1x16x1xf32>
    %145 = vector.shape_cast %144 : vector<1x16x1xf32> to vector<16x1xf32>
    %146 = vector.broadcast %145 : vector<16x1xf32> to vector<16x128xf32>
    %147 = arith.addf %143, %146 : vector<16x128xf32>
    %cst_71 = arith.constant 0.000000e+00 : f32
    %148 = vector.broadcast %cst_71 : f32 to vector<16x128xf32>
    %149 = arith.maximumf %147, %148 : vector<16x128xf32>
    %c3_72 = arith.constant 3 : index
    %c0_73 = arith.constant 0 : index
    %c0_74 = arith.constant 0 : index
    %150 = vector.load %arg7[%c3_72, %c0_73, %c0_74] : memref<4x16x16xbf16, #tpu.memory_space<vmem>>, vector<1x16x16xbf16>
    %151 = vector.shape_cast %150 : vector<1x16x16xbf16> to vector<16x16xbf16>
    %152 = arith.truncf %149 : vector<16x128xf32> to vector<16x128xbf16>
    %cst_75 = arith.constant dense<0.000000e+00> : vector<16x128xf32>
    %153 = tpu.matmul %151, %152, %cst_75 {dimension_numbers = #tpu.dot_dimension_numbers<[1], [0], [0], [1], [0, 0, 1, 1], [], []>} : vector<16x16xbf16>, vector<16x128xbf16>, vector<16x128xf32> -> vector<16x128xf32>
    %c3_76 = arith.constant 3 : index
    %c0_77 = arith.constant 0 : index
    %c0_78 = arith.constant 0 : index
    %154 = vector.load %arg8[%c3_76, %c0_77, %c0_78] : memref<4x16x1xf32, #tpu.memory_space<vmem>>, vector<1x16x1xf32>
    %155 = vector.shape_cast %154 : vector<1x16x1xf32> to vector<16x1xf32>
    %156 = vector.broadcast %155 : vector<16x1xf32> to vector<16x128xf32>
    %157 = arith.addf %153, %156 : vector<16x128xf32>
    %158 = arith.addf %124, %157 : vector<16x128xf32>
    %159 = vector.broadcast %3 : vector<1x128xf32> to vector<16x128xf32>
    %160 = arith.mulf %158, %159 : vector<16x128xf32>
    %c0_79 = arith.constant 0 : index
    %c0_80 = arith.constant 0 : index
    %161 = vector.load %arg9[%c0_79, %c0_80] : memref<5x16xbf16, #tpu.memory_space<vmem>>, vector<5x16xbf16>
    %162 = arith.truncf %160 : vector<16x128xf32> to vector<16x128xbf16>
    %cst_81 = arith.constant dense<0.000000e+00> : vector<5x128xf32>
    %163 = tpu.matmul %161, %162, %cst_81 {dimension_numbers = #tpu.dot_dimension_numbers<[1], [0], [0], [1], [0, 0, 1, 1], [], []>} : vector<5x16xbf16>, vector<16x128xbf16>, vector<5x128xf32> -> vector<5x128xf32>
    %c0_82 = arith.constant 0 : index
    %c0_83 = arith.constant 0 : index
    %164 = vector.load %arg10[%c0_82, %c0_83] : memref<5x1xf32, #tpu.memory_space<vmem>>, vector<5x1xf32>
    %165 = vector.broadcast %164 : vector<5x1xf32> to vector<5x128xf32>
    %166 = arith.addf %163, %165 : vector<5x128xf32>
    %167 = vector.broadcast %3 : vector<1x128xf32> to vector<5x128xf32>
    %168 = arith.mulf %166, %167 : vector<5x128xf32>
    %c0_84 = arith.constant 0 : index
    %c0_85 = arith.constant 0 : index
    %c0_86 = arith.constant 0 : index
    %169 = vector.load %arg11[%c0_84, %c0_85, %c0_86] : memref<1x5x128xf32, #tpu.memory_space<vmem>>, vector<1x5x128xf32>
    %170 = vector.shape_cast %169 : vector<1x5x128xf32> to vector<5x128xf32>
    %171 = vector.shape_cast %168 : vector<5x128xf32> to vector<1x5x128xf32>
    tpu.vector_store %arg11[%c0_84, %c0_85, %c0_86], %171 {strides = array<i32>} : memref<1x5x128xf32, #tpu.memory_space<vmem>>, vector<1x5x128xf32>,
    return
  }
  func.func @transform_0(%arg0: i32) -> (i32, i32, i32) {
    %c0_i32 = arith.constant 0 : i32
    %c0_i32_0 = arith.constant 0 : i32
    %c0_i32_1 = arith.constant 0 : i32
    return %arg0, %c0_i32, %c0_i32_0 : i32, i32, i32
  }
  func.func @transform_1(%arg0: i32) -> (i32, i32, i32) {
    %c0_i32 = arith.constant 0 : i32
    %c0_i32_0 = arith.constant 0 : i32
    %c0_i32_1 = arith.constant 0 : i32
    return %arg0, %c0_i32, %c0_i32_0 : i32, i32, i32
  }
  func.func @transform_2(%arg0: i32) -> (i32, i32) {
    %c0_i32 = arith.constant 0 : i32
    %c0_i32_0 = arith.constant 0 : i32
    %c0_i32_1 = arith.constant 0 : i32
    return %c0_i32, %c0_i32_0 : i32, i32
  }
  func.func @transform_3(%arg0: i32) -> (i32, i32) {
    %c0_i32 = arith.constant 0 : i32
    %c0_i32_0 = arith.constant 0 : i32
    %c0_i32_1 = arith.constant 0 : i32
    return %c0_i32, %c0_i32_0 : i32, i32
  }
  func.func @transform_4(%arg0: i32) -> (i32, i32, i32) {
    %c0_i32 = arith.constant 0 : i32
    %c0_i32_0 = arith.constant 0 : i32
    %c0_i32_1 = arith.constant 0 : i32
    %c0_i32_2 = arith.constant 0 : i32
    return %c0_i32, %c0_i32_0, %c0_i32_1 : i32, i32, i32
  }
  func.func @transform_5(%arg0: i32) -> (i32, i32, i32) {
    %c0_i32 = arith.constant 0 : i32
    %c0_i32_0 = arith.constant 0 : i32
    %c0_i32_1 = arith.constant 0 : i32
    %c0_i32_2 = arith.constant 0 : i32
    return %c0_i32, %c0_i32_0, %c0_i32_1 : i32, i32, i32
  }
  func.func @transform_6(%arg0: i32) -> (i32, i32, i32) {
    %c0_i32 = arith.constant 0 : i32
    %c0_i32_0 = arith.constant 0 : i32
    %c0_i32_1 = arith.constant 0 : i32
    %c0_i32_2 = arith.constant 0 : i32
    return %c0_i32, %c0_i32_0, %c0_i32_1 : i32, i32, i32
  }
  func.func @transform_7(%arg0: i32) -> (i32, i32, i32) {
    %c0_i32 = arith.constant 0 : i32
    %c0_i32_0 = arith.constant 0 : i32
    %c0_i32_1 = arith.constant 0 : i32
    %c0_i32_2 = arith.constant 0 : i32
    return %c0_i32, %c0_i32_0, %c0_i32_1 : i32, i32, i32
  }
  func.func @transform_8(%arg0: i32) -> (i32, i32) {
    %c0_i32 = arith.constant 0 : i32
    %c0_i32_0 = arith.constant 0 : i32
    %c0_i32_1 = arith.constant 0 : i32
    return %c0_i32, %c0_i32_0 : i32, i32
  }
  func.func @transform_9(%arg0: i32) -> (i32, i32) {
    %c0_i32 = arith.constant 0 : i32
    %c0_i32_0 = arith.constant 0 : i32
    %c0_i32_1 = arith.constant 0 : i32
    return %c0_i32, %c0_i32_0 : i32, i32
  }
  func.func @transform_10(%arg0: i32) -> (i32, i32, i32) {
    %c0_i32 = arith.constant 0 : i32
    %c0_i32_0 = arith.constant 0 : i32
    %c0_i32_1 = arith.constant 0 : i32
    return %arg0, %c0_i32, %c0_i32_0 : i32, i32, i32
  }
}

</mosaic_0001>

<llo_original>
// kernel: single_stage_forward.1
$region0: #{single_stage_forward.1}
  #allocation0 [shape = 'u32[]', space=smem, size = 0x4, offset = 0x4, fixed_abs, tag = 'smem constant byte address 0x4 - core index']
  #allocation1 [shape = 'u32[72,128]{1,0:T(1,128)}', space=vmem, size = 0x9000, scoped, tag = 'internal scratch']
  %s0 = inlined_call_operand.vmem [shape: f32[2,6,128], index: 0, kind: input, shape index: {}]
  %s1 = inlined_call_operand.vmem [shape: f32[2,1,128], index: 1, kind: input, shape index: {}]
  %s2 = inlined_call_operand.vmem [shape: bf16[16,6], index: 2, kind: input, shape index: {}]
  %s3 = inlined_call_operand.vmem [shape: f32[16,1], index: 3, kind: input, shape index: {}]
  %s4 = inlined_call_operand.vmem [shape: bf16[4,16,48], index: 4, kind: input, shape index: {}]
  %s5 = inlined_call_operand.vmem [shape: f32[4,16,1], index: 5, kind: input, shape index: {}]
  %s6 = inlined_call_operand.vmem [shape: bf16[4,16,16], index: 6, kind: input, shape index: {}]
  %s7 = inlined_call_operand.vmem [shape: f32[4,16,1], index: 7, kind: input, shape index: {}]
  %s8 = inlined_call_operand.vmem [shape: bf16[5,16], index: 8, kind: input, shape index: {}]
  %s9 = inlined_call_operand.vmem [shape: f32[5,1], index: 9, kind: input, shape index: {}]
  %s10 = inlined_call_operand.vmem [shape: f32[2,5,128], index: 10, kind: output, shape index: {}]
  %s11 = sld [smem:[#allocation0]]
  $region73: #{single_stage_forward.1} parent=0
    _
  %s13 = ssub.s32 1, %s11
  %s14 = scalar_select 0, %s13, %s11
  loop: start=0, step=1, limit=4
  $region2: #{single_stage_forward.1} parent=0 // loop_pre_header
    _
  $region3: #{single_stage_forward.1} parent=0 // loop_header
    %s16 = sphi 0, %s20
    %p17 = scmp.ge.s32.totalorder %s16, 4
    %s26 = sphi 0, %s28
    %s29 = sphi 0, %s26
    %s30 = sphi 0, %s29
    %s46 = sphi 0, %s30
    %s52 = sphi 0, %s54
    %s55 = sphi 0, %s52
    %s56 = sphi 0, %s55
    %s72 = sphi 0, %s56
    %s76 = sphi 0, %s76
    %s78 = sphi 0, %s76
    %s79 = sphi 0, %s78
    %s93 = sphi 0, %s79
    %s97 = sphi 0, %s97
    %s99 = sphi 0, %s97
    %s100 = sphi 0, %s99
    %s114 = sphi 0, %s100
    %s118 = sphi 0, %s118
    %s120 = sphi 0, %s118
    %s121 = sphi 0, %s120
    %s135 = sphi 0, %s121
    %s139 = sphi 0, %s139
    %s141 = sphi 0, %s139
    %s142 = sphi 0, %s141
    %s156 = sphi 0, %s142
    %s160 = sphi 0, %s160
    %s162 = sphi 0, %s160
    %s163 = sphi 0, %s162
    %s177 = sphi 0, %s163
    %s181 = sphi 0, %s181
    %s183 = sphi 0, %s181
    %s184 = sphi 0, %s183
    %s198 = sphi 0, %s184
    %s202 = sphi 0, %s202
    %s204 = sphi 0, %s202
    %s205 = sphi 0, %s204
    %s219 = sphi 0, %s205
    %s223 = sphi 0, %s223
    %s225 = sphi 0, %s223
    %s226 = sphi 0, %s225
    %s240 = sphi 0, %s226
    %s246 = sphi 0, %s248
    %s249 = sphi 0, %s246
    %s250 = sphi 0, %s249
    %s266 = sphi 0, %s250
  $region4: #{single_stage_forward.1} parent=0 // loop_header_branch
    %19 = sbr.rel (%p17) target = $region8
  $region5: #{single_stage_forward.1} parent=0 // loop_body
    %s21 = ssub.s32 %s16, 1
    %s22 = ssub.s32 %s16, 2
    %s23 = sadd.s32 %s16, 1
    %s24 = ssub.s32 %s16, %s23
    %p25 = scmp.eq.s32.totalorder %s24, 0
    %s27 = sadd.s32 %s26, 1
    %s28 = scalar_select %p25, %s26, %s27
    %p31 = pneg %p25
    %p32 = scmp.eq.s32.totalorder %s16, 1
    %p33 = por %p31, %p32
    %p34 = scmp.ne.s32.totalorder %s26, %s29
    %p35 = scmp.eq.s32.totalorder %s16, 0
    %p36 = por %p34, %p35
    %p37 = scmp.ne.s32.totalorder %s26, %s29
    %p38 = scmp.eq.s32.totalorder %s21, 1
    %p39 = por %p37, %p38
    %p40 = scmp.ne.s32.totalorder %s29, %s30
    %p41 = scmp.eq.s32.totalorder %s21, 0
    %p42 = por %p40, %p41
    %p43 = scmp.ne.s32.totalorder %s29, %s30
    %p44 = scmp.eq.s32.totalorder %s22, 1
    %p45 = por %p43, %p44
    %p47 = scmp.ne.s32.totalorder %s30, %s46
    %p48 = scmp.eq.s32.totalorder %s22, 0
    %p49 = por %p47, %p48
    %s50 = ssub.s32 %s16, %s23
    %p51 = scmp.eq.s32.totalorder %s50, 0
    %s53 = sadd.s32 %s52, 1
    %s54 = scalar_select %p51, %s52, %s53
    %p57 = pneg %p51
    %p58 = scmp.eq.s32.totalorder %s16, 1
    %p59 = por %p57, %p58
    %p60 = scmp.ne.s32.totalorder %s52, %s55
    %p61 = scmp.eq.s32.totalorder %s16, 0
    %p62 = por %p60, %p61
    %p63 = scmp.ne.s32.totalorder %s52, %s55
    %p64 = scmp.eq.s32.totalorder %s21, 1
    %p65 = por %p63, %p64
    %p66 = scmp.ne.s32.totalorder %s55, %s56
    %p67 = scmp.eq.s32.totalorder %s21, 0
    %p68 = por %p66, %p67
    %p69 = scmp.ne.s32.totalorder %s55, %s56
    %p70 = scmp.eq.s32.totalorder %s22, 1
    %p71 = por %p69, %p70
    %p73 = scmp.ne.s32.totalorder %s56, %s72
    %p74 = scmp.eq.s32.totalorder %s22, 0
    %p75 = por %p73, %p74
    %s77 = sadd.s32 %s76, 1
    %p80 = scmp.eq.s32.totalorder %s16, 1
    %p81 = scmp.ne.s32.totalorder %s76, %s78
    %p82 = scmp.eq.s32.totalorder %s16, 0
    %p83 = por %p81, %p82
    %p84 = scmp.ne.s32.totalorder %s76, %s78
    %p85 = scmp.eq.s32.totalorder %s21, 1
    %p86 = por %p84, %p85
    %p87 = scmp.ne.s32.totalorder %s78, %s79
    %p88 = scmp.eq.s32.totalorder %s21, 0
    %p89 = por %p87, %p88
    %p90 = scmp.ne.s32.totalorder %s78, %s79
    %p91 = scmp.eq.s32.totalorder %s22, 1
    %p92 = por %p90, %p91
    %p94 = scmp.ne.s32.totalorder %s79, %s93
    %p95 = scmp.eq.s32.totalorder %s22, 0
    %p96 = por %p94, %p95
    %s98 = sadd.s32 %s97, 1
    %p101 = scmp.eq.s32.totalorder %s16, 1
    %p102 = scmp.ne.s32.totalorder %s97, %s99
    %p103 = scmp.eq.s32.totalorder %s16, 0
    %p104 = por %p102, %p103
    %p105 = scmp.ne.s32.totalorder %s97, %s99
    %p106 = scmp.eq.s32.totalorder %s21, 1
    %p107 = por %p105, %p106
    %p108 = scmp.ne.s32.totalorder %s99, %s100
    %p109 = scmp.eq.s32.totalorder %s21, 0
    %p110 = por %p108, %p109
    %p111 = scmp.ne.s32.totalorder %s99, %s100
    %p112 = scmp.eq.s32.totalorder %s22, 1
    %p113 = por %p111, %p112
    %p115 = scmp.ne.s32.totalorder %s100, %s114
    %p116 = scmp.eq.s32.totalorder %s22, 0
    %p117 = por %p115, %p116
    %s119 = sadd.s32 %s118, 1
    %p122 = scmp.eq.s32.totalorder %s16, 1
    %p123 = scmp.ne.s32.totalorder %s118, %s120
    %p124 = scmp.eq.s32.totalorder %s16, 0
    %p125 = por %p123, %p124
    %p126 = scmp.ne.s32.totalorder %s118, %s120
    %p127 = scmp.eq.s32.totalorder %s21, 1
    %p128 = por %p126, %p127
    %p129 = scmp.ne.s32.totalorder %s120, %s121
    %p130 = scmp.eq.s32.totalorder %s21, 0
    %p131 = por %p129, %p130
    %p132 = scmp.ne.s32.totalorder %s120, %s121
    %p133 = scmp.eq.s32.totalorder %s22, 1
    %p134 = por %p132, %p133
    %p136 = scmp.ne.s32.totalorder %s121, %s135
    %p137 = scmp.eq.s32.totalorder %s22, 0
    %p138 = por %p136, %p137
    %s140 = sadd.s32 %s139, 1
    %p143 = scmp.eq.s32.totalorder %s16, 1
    %p144 = scmp.ne.s32.totalorder %s139, %s141
    %p145 = scmp.eq.s32.totalorder %s16, 0
    %p146 = por %p144, %p145
    %p147 = scmp.ne.s32.totalorder %s139, %s141
    %p148 = scmp.eq.s32.totalorder %s21, 1
    %p149 = por %p147, %p148
    %p150 = scmp.ne.s32.totalorder %s141, %s142
    %p151 = scmp.eq.s32.totalorder %s21, 0
    %p152 = por %p150, %p151
    %p153 = scmp.ne.s32.totalorder %s141, %s142
    %p154 = scmp.eq.s32.totalorder %s22, 1
    %p155 = por %p153, %p154
    %p157 = scmp.ne.s32.totalorder %s142, %s156
    %p158 = scmp.eq.s32.totalorder %s22, 0
    %p159 = por %p157, %p158
    %s161 = sadd.s32 %s160, 1
    %p164 = scmp.eq.s32.totalorder %s16, 1
    %p165 = scmp.ne.s32.totalorder %s160, %s162
    %p166 = scmp.eq.s32.totalorder %s16, 0
    %p167 = por %p165, %p166
    %p168 = scmp.ne.s32.totalorder %s160, %s162
    %p169 = scmp.eq.s32.totalorder %s21, 1
    %p170 = por %p168, %p169
    %p171 = scmp.ne.s32.totalorder %s162, %s163
    %p172 = scmp.eq.s32.totalorder %s21, 0
    %p173 = por %p171, %p172
    %p174 = scmp.ne.s32.totalorder %s162, %s163
    %p175 = scmp.eq.s32.totalorder %s22, 1
    %p176 = por %p174, %p175
    %p178 = scmp.ne.s32.totalorder %s163, %s177
    %p179 = scmp.eq.s32.totalorder %s22, 0
    %p180 = por %p178, %p179
    %s182 = sadd.s32 %s181, 1
    %p185 = scmp.eq.s32.totalorder %s16, 1
    %p186 = scmp.ne.s32.totalorder %s181, %s183
    %p187 = scmp.eq.s32.totalorder %s16, 0
    %p188 = por %p186, %p187
    %p189 = scmp.ne.s32.totalorder %s181, %s183
    %p190 = scmp.eq.s32.totalorder %s21, 1
    %p191 = por %p189, %p190
    %p192 = scmp.ne.s32.totalorder %s183, %s184
    %p193 = scmp.eq.s32.totalorder %s21, 0
    %p194 = por %p192, %p193
    %p195 = scmp.ne.s32.totalorder %s183, %s184
    %p196 = scmp.eq.s32.totalorder %s22, 1
    %p197 = por %p195, %p196
    %p199 = scmp.ne.s32.totalorder %s184, %s198
    %p200 = scmp.eq.s32.totalorder %s22, 0
    %p201 = por %p199, %p200
    %s203 = sadd.s32 %s202, 1
    %p206 = scmp.eq.s32.totalorder %s16, 1
    %p207 = scmp.ne.s32.totalorder %s202, %s204
    %p208 = scmp.eq.s32.totalorder %s16, 0
    %p209 = por %p207, %p208
    %p210 = scmp.ne.s32.totalorder %s202, %s204
    %p211 = scmp.eq.s32.totalorder %s21, 1
    %p212 = por %p210, %p211
    %p213 = scmp.ne.s32.totalorder %s204, %s205
    %p214 = scmp.eq.s32.totalorder %s21, 0
    %p215 = por %p213, %p214
    %p216 = scmp.ne.s32.totalorder %s204, %s205
    %p217 = scmp.eq.s32.totalorder %s22, 1
    %p218 = por %p216, %p217
    %p220 = scmp.ne.s32.totalorder %s205, %s219
    %p221 = scmp.eq.s32.totalorder %s22, 0
    %p222 = por %p220, %p221
    %s224 = sadd.s32 %s223, 1
    %p227 = scmp.eq.s32.totalorder %s16, 1
    %p228 = scmp.ne.s32.totalorder %s223, %s225
    %p229 = scmp.eq.s32.totalorder %s16, 0
    %p230 = por %p228, %p229
    %p231 = scmp.ne.s32.totalorder %s223, %s225
    %p232 = scmp.eq.s32.totalorder %s21, 1
    %p233 = por %p231, %p232
    %p234 = scmp.ne.s32.totalorder %s225, %s226
    %p235 = scmp.eq.s32.totalorder %s21, 0
    %p236 = por %p234, %p235
    %p237 = scmp.ne.s32.totalorder %s225, %s226
    %p238 = scmp.eq.s32.totalorder %s22, 1
    %p239 = por %p237, %p238
    %p241 = scmp.ne.s32.totalorder %s226, %s240
    %p242 = scmp.eq.s32.totalorder %s22, 0
    %p243 = por %p241, %p242
    %s244 = ssub.s32 %s16, %s23
    %p245 = scmp.eq.s32.totalorder %s244, 0
    %s247 = sadd.s32 %s246, 1
    %s248 = scalar_select %p245, %s246, %s247
    %p251 = pneg %p245
    %p252 = scmp.eq.s32.totalorder %s16, 1
    %p253 = por %p251, %p252
    %p254 = scmp.ne.s32.totalorder %s246, %s249
    %p255 = scmp.eq.s32.totalorder %s16, 0
    %p256 = por %p254, %p255
    %p257 = scmp.ne.s32.totalorder %s246, %s249
    %p258 = scmp.eq.s32.totalorder %s21, 1
    %p259 = por %p257, %p258
    %p260 = scmp.ne.s32.totalorder %s249, %s250
    %p261 = scmp.eq.s32.totalorder %s21, 0
    %p262 = por %p260, %p261
    %p263 = scmp.ne.s32.totalorder %s249, %s250
    %p264 = scmp.eq.s32.totalorder %s22, 1
    %p265 = por %p263, %p264
    %p267 = scmp.ne.s32.totalorder %s250, %s266
    %p268 = scmp.eq.s32.totalorder %s22, 0
    %p269 = por %p267, %p268
    %p270 = scmp.le.s32.totalorder 1, %s16
    %p271 = scmp.lt.s32.totalorder %s16, 3
    %p272 = pnand %p270, %p271
    %p273 = pneg %p272
    // Predicated region
    $region9: #{single_stage_forward.1} parent=5 // pred_check
      _
    $region10: #{single_stage_forward.1} parent=5 // pred_check_branch
      %275 = sbr.rel (%p272) target = $region12
    $region11: #{single_stage_forward.1} parent=5 // pred_region
      %s276 = ssub.s32 %s16, 1
      // Predicated region
      $region13: #{single_stage_forward.1} parent=11 // pred_check
        %p277 = pneg %p89
      $region14: #{single_stage_forward.1} parent=11 // pred_check_branch
        %279 = sbr.rel (%p277) target = $region16
      $region15: #{single_stage_forward.1} parent=11 // pred_region
        _
      $region16: #{single_stage_forward.1} parent=11 // pred_fallthru
        _
      // Predicated region
      $region17: #{single_stage_forward.1} parent=11 // pred_check
        %p280 = pneg %p110
      $region18: #{single_stage_forward.1} parent=11 // pred_check_branch
        %282 = sbr.rel (%p280) target = $region20
      $region19: #{single_stage_forward.1} parent=11 // pred_region
        _
      $region20: #{single_stage_forward.1} parent=11 // pred_fallthru
        _
      // Predicated region
      $region21: #{single_stage_forward.1} parent=11 // pred_check
        %p283 = pneg %p131
      $region22: #{single_stage_forward.1} parent=11 // pred_check_branch
        %285 = sbr.rel (%p283) target = $region24
      $region23: #{single_stage_forward.1} parent=11 // pred_region
        _
      $region24: #{single_stage_forward.1} parent=11 // pred_fallthru
        _
      // Predicated region
      $region25: #{single_stage_forward.1} parent=11 // pred_check
        %p286 = pneg %p152
      $region26: #{single_stage_forward.1} parent=11 // pred_check_branch
        %288 = sbr.rel (%p286) target = $region28
      $region27: #{single_stage_forward.1} parent=11 // pred_region
        _
      $region28: #{single_stage_forward.1} parent=11 // pred_fallthru
        _
      // Predicated region
      $region29: #{single_stage_forward.1} parent=11 // pred_check
        %p289 = pneg %p173
      $region30: #{single_stage_forward.1} parent=11 // pred_check_branch
        %291 = sbr.rel (%p289) target = $region32
      $region31: #{single_stage_forward.1} parent=11 // pred_region
        _
      $region32: #{single_stage_forward.1} parent=11 // pred_fallthru
        _
      // Predicated region
      $region33: #{single_stage_forward.1} parent=11 // pred_check
        %p292 = pneg %p194
      $region34: #{single_stage_forward.1} parent=11 // pred_check_branch
        %294 = sbr.rel (%p292) target = $region36
      $region35: #{single_stage_forward.1} parent=11 // pred_region
        _
      $region36: #{single_stage_forward.1} parent=11 // pred_fallthru
        _
      // Predicated region
      $region37: #{single_stage_forward.1} parent=11 // pred_check
        %p295 = pneg %p215
      $region38: #{single_stage_forward.1} parent=11 // pred_check_branch
        %297 = sbr.rel (%p295) target = $region40
      $region39: #{single_stage_forward.1} parent=11 // pred_region
        _
      $region40: #{single_stage_forward.1} parent=11 // pred_fallthru
        _
      // Predicated region
      $region41: #{single_stage_forward.1} parent=11 // pred_check
        %p298 = pneg %p236
      $region42: #{single_stage_forward.1} parent=11 // pred_check_branch
        %300 = sbr.rel (%p298) target = $region44
      $region43: #{single_stage_forward.1} parent=11 // pred_region
        _
      $region44: #{single_stage_forward.1} parent=11 // pred_fallthru
        _
    $region12: #{single_stage_forward.1} parent=5 // pred_fallthru
      _
    %p301 = scmp.lt.s32.totalorder %s16, 2
    // Predicated region
    $region45: #{single_stage_forward.1} parent=5 // pred_check
      %p302 = pneg %p301
    $region46: #{single_stage_forward.1} parent=5 // pred_check_branch
      %304 = sbr.rel (%p302) target = $region48
    $region47: #{single_stage_forward.1} parent=5 // pred_region
      // Predicated region
      $region49: #{single_stage_forward.1} parent=47 // pred_check
        %p305 = pneg %p36
      $region50: #{single_stage_forward.1} parent=47 // pred_check_branch
        %307 = sbr.rel (%p305) target = $region52
      $region51: #{single_stage_forward.1} parent=47 // pred_region
        %p308 = scmp.lt.s32.totalorder %s16, 1
        %s309 = scalar_select %p308, %s16, 1
        %s310 = smul.addr %s309, 8
        %s311 = scalar_lea.vmem %s0, %s310
      $region52: #{single_stage_forward.1} parent=47 // pred_fallthru
        _
      // Predicated region
      $region53: #{single_stage_forward.1} parent=47 // pred_check
        %p312 = pneg %p62
      $region54: #{single_stage_forward.1} parent=47 // pred_check_branch
        %314 = sbr.rel (%p312) target = $region56
      $region55: #{single_stage_forward.1} parent=47 // pred_region
        %p315 = scmp.lt.s32.totalorder %s16, 1
        %s316 = scalar_select %p315, %s16, 1
        %s317 = scalar_lea.vmem %s1, %s316
      $region56: #{single_stage_forward.1} parent=47 // pred_fallthru
        _
    $region48: #{single_stage_forward.1} parent=5 // pred_fallthru
      _
    %p318 = scmp.le.s32.totalorder 1, %s16
    %p319 = scmp.lt.s32.totalorder %s16, 3
    %p320 = pnand %p318, %p319
    %p321 = pneg %p320
    // Predicated region
    $region57: #{single_stage_forward.1} parent=5 // pred_check
      _
    $region58: #{single_stage_forward.1} parent=5 // pred_check_branch
      %323 = sbr.rel (%p320) target = $region60
    $region59: #{single_stage_forward.1} parent=5 // pred_region
      %s324 = ssub.s32 %s16, 1
      %p325 = scmp.lt.s32.totalorder %s21, 1
      %s326 = scalar_select %p325, %s21, 1
      %s327 = smul.addr %s326, 8
      %s328 = scalar_lea.vmem %s0, %s327
      %p329 = pneg %p42
      %p330 = pneg %p39
      %p331 = scmp.lt.s32.totalorder %s21, 1
      %s332 = scalar_select %p331, %s21, 1
      %s333 = scalar_lea.vmem %s1, %s332
      %p334 = pneg %p68
      %p335 = pneg %p65
      %p336 = pneg %p89
      %p337 = pneg %p86
      %p338 = pneg %p110
      %p339 = pneg %p107
      %p340 = pneg %p131
      %p341 = pneg %p128
      %p342 = pneg %p152
      %p343 = pneg %p149
      %p344 = pneg %p173
      %p345 = pneg %p170
      %p346 = pneg %p194
      %p347 = pneg %p191
      %p348 = pneg %p215
      %p349 = pneg %p212
      %p350 = pneg %p236
      %p351 = pneg %p233
      %p352 = pneg %p262
      %p353 = pneg %p259
      %p354 = scmp.lt.s32.totalorder %s21, 1
      %s355 = scalar_select %p354, %s21, 1
      %s356 = smul.addr %s355, 8
      %s357 = scalar_lea.vmem %s10, %s356
      %p358 = scmp.lt.s32.totalorder %s21, 1
      %s359 = scalar_select %p358, %s21, 1
      %s360 = smul.addr %s359, 8
      %s361 = scalar_lea.vmem %s0, %s360
      %p362 = scmp.lt.s32.totalorder %s21, 1
      %s363 = scalar_select %p362, %s21, 1
      %s364 = scalar_lea.vmem %s1, %s363
      %p365 = scmp.lt.s32.totalorder %s21, 1
      %s366 = scalar_select %p365, %s21, 1
      %s367 = smul.addr %s366, 8
      %s368 = scalar_lea.vmem %s10, %s367
      %v370 = vld [vmem:[%s361] sm:$0x3f]
      %v371 = vld [vmem:[%s364] sm:$0x1]
      %v372 = vlaneseq
      %v373 = vand.u32 %v372, 127
      %v374 = vld [vmem:[%s2] sm:$0xf]
      %v375 = vld [vmem:[%s2 + $0x4] sm:$0xf]
      %v376 = vpack.c.bf16 %v370, %v370
      %v377 = vld [vmem:[%s3] sm:$0xff]
      %v378 = vld [vmem:[%s3 + $0x8] sm:$0xff]
      %380 = vset.pattern.permute.xlu0 0
      %381 = vperm.xlu0 %380, %v377
      %v382 = vpop.permute.xlu0 %381
      %385 = vset.pattern.permute.xlu0 0
      %386 = vperm.xlu0 %385, %v378
      %v387 = vpop.permute.xlu0 %386
      %v391 = vunpack.c.l.b16 %v374
      %v392 = vunpack.c.l.b16 %v375
      %v393 = vpack.c.b16 %v392, %v391
      %vm394 = vcmask 48128
      %v396 = vsel %vm394, %v393, 0
      %vm398 = vcmask 1042432
      %v400 = vsel %vm398, %v376, 0
      %402 = vmatpush.bf16.msra.mxu0 0
      %403 = vmatpush.bf16.msra.mxu0 0
      %404 = vmatpush.bf16.msra.mxu0 0
      %405 = vmatpush.bf16.msra.mxu0 0
      %406 = vmatpush.bf16.msra.mxu0 0
      %407 = vmatpush.bf16.msra.mxu0 0
      %408 = vmatpush.bf16.msra.mxu0 0
      %409 = vmatpush.bf16.msra.mxu0 %v400
      %410 = vmatmul.bf16.gmra.mxu0 %v396
      %v411 = vpop.f32.mrf.mxu0
      %v412 = vadd.f32 %v382, %v411
      %v413 = vpop.f32.mrf.mxu0
      %v414 = vadd.f32 %v387, %v413
      %415 = vdwg.mxu0
      %vm416 = vcmp.lt.s32.totalorder %v373, 64
      %v417 = vsel %vm416, 1, 0
      %vm418 = vcmp.eq.s32.totalorder %v417, 1
      %v419 = vsel %vm418, %v412, 0.0
      %v420 = vsel %vm418, %v414, 0.0
      %421 = vrot.lane.b32.xlu0 %v419, 1
      %v422 = vpop.permute.xlu0 %421
      %423 = vrot.lane.b32.xlu0 %v420, 1
      %v424 = vpop.permute.xlu0 %423
      %vm425 = vcmp.ge.s32.totalorder %v373, 1
      %v426 = vsel %vm425, 1, 0
      %vm427 = vcmp.eq.s32.totalorder %v426, 1
      %v428 = vsel %vm427, %v422, 0.0
      %v429 = vsel %vm427, %v424, 0.0
      %430 = vrot.lane.b32.xlu0 %v419, 127
      %v431 = vpop.permute.xlu0 %430
      %432 = vrot.lane.b32.xlu0 %v420, 127
      %v433 = vpop.permute.xlu0 %432
      %vm434 = vcmp.lt.s32.totalorder %v373, 63
      %v435 = vsel %vm434, 1, 0
      %vm436 = vcmp.eq.s32.totalorder %v435, 1
      %v437 = vsel %vm436, %v431, 0.0
      %v438 = vsel %vm436, %v433, 0.0
      %v439 = vpack.c.bf16 %v429, %v428
      %v440 = vpack.c.bf16 %v420, %v419
      %v441 = vpack.c.bf16 %v438, %v437
      %v442 = vld [vmem:[%s4] sm:$0xf]
      %v443 = vld [vmem:[%s4 + $0x4] sm:$0xf]
      %v444 = vld [vmem:[%s5] sm:$0xff]
      %v445 = vld [vmem:[%s5 + $0x8] sm:$0xff]
      %447 = vset.pattern.permute.xlu0 0
      %448 = vperm.xlu0 %447, %v444
      %v449 = vpop.permute.xlu0 %448
      %452 = vset.pattern.permute.xlu0 0
      %453 = vperm.xlu0 %452, %v445
      %v454 = vpop.permute.xlu0 %453
      %v458 = vunpack.c.l.b16 %v442
      %v459 = vunpack.c.l.b16 %v443
      %v460 = vpack.c.b16 %v459, %v458
      %vm461 = vcmask 392192
      %v463 = vsel %vm461, %v460, 0
      %465 = vmatpush.bf16.msra.mxu0 0
      %466 = vmatpush.bf16.msra.mxu0 0
      %467 = vmatpush.bf16.msra.mxu0 0
      %468 = vmatpush.bf16.msra.mxu0 0
      %469 = vmatpush.bf16.msra.mxu0 0
      %470 = vmatpush.bf16.msra.mxu0 %v441
      %471 = vmatpush.bf16.msra.mxu0 %v440
      %472 = vmatpush.bf16.msra.mxu0 %v439
      %473 = vmatmul.bf16.gmra.mxu0 %v463
      %v474 = vpop.f32.mrf.mxu0
      %v475 = vadd.f32 %v449, %v474
      %v476 = vpop.f32.mrf.mxu0
      %v477 = vadd.f32 %v454, %v476
      %478 = vdwg.mxu0
      %v479 = vmax.f32 %v475, 0.0
      %v480 = vmax.f32 %v477, 0.0
      %v481 = vld [vmem:[%s6] sm:$0xf]
      %v482 = vld [vmem:[%s6 + $0x4] sm:$0xf]
      %v483 = vpack.c.bf16 %v480, %v479
      %v484 = vld [vmem:[%s7] sm:$0xff]
      %v485 = vld [vmem:[%s7 + $0x8] sm:$0xff]
      %487 = vset.pattern.permute.xlu0 0
      %488 = vperm.xlu0 %487, %v484
      %v489 = vpop.permute.xlu0 %488
      %492 = vset.pattern.permute.xlu0 0
      %493 = vperm.xlu0 %492, %v485
      %v494 = vpop.permute.xlu0 %493
      %v498 = vunpack.c.l.b16 %v481
      %v499 = vunpack.c.l.b16 %v482
      %v500 = vpack.c.b16 %v499, %v498
      %vm501 = vcmask 130048
      %v503 = vsel %vm501, %v500, 0
      %505 = vmatpush.bf16.msra.mxu0 0
      %506 = vmatpush.bf16.msra.mxu0 0
      %507 = vmatpush.bf16.msra.mxu0 0
      %508 = vmatpush.bf16.msra.mxu0 0
      %509 = vmatpush.bf16.msra.mxu0 0
      %510 = vmatpush.bf16.msra.mxu0 0
      %511 = vmatpush.bf16.msra.mxu0 0
      %512 = vmatpush.bf16.msra.mxu0 %v483
      %513 = vmatmul.bf16.gmra.mxu0 %v503
      %v514 = vpop.f32.mrf.mxu0
      %v515 = vadd.f32 %v489, %v514
      %v516 = vpop.f32.mrf.mxu0
      %v517 = vadd.f32 %v494, %v516
      %518 = vdwg.mxu0
      %v519 = vadd.f32 %v419, %v515
      %v520 = vadd.f32 %v420, %v517
      %v522 = vperm.slane %v371, 0
      %v524 = vmul.f32 %v519, %v522
      %v525 = vmul.f32 %v520, %v522
      %526 = vrot.lane.b32.xlu0 %v524, 2
      %v527 = vpop.permute.xlu0 %526
      %528 = vrot.lane.b32.xlu0 %v525, 2
      %v529 = vpop.permute.xlu0 %528
      %vm530 = vcmp.ge.s32.totalorder %v373, 2
      %v531 = vsel %vm530, 1, 0
      %vm532 = vcmp.eq.s32.totalorder %v531, 1
      %v533 = vsel %vm532, %v527, 0.0
      %v534 = vsel %vm532, %v529, 0.0
      %535 = vrot.lane.b32.xlu0 %v524, 126
      %v536 = vpop.permute.xlu0 %535
      %537 = vrot.lane.b32.xlu0 %v525, 126
      %v538 = vpop.permute.xlu0 %537
      %vm539 = vcmp.lt.s32.totalorder %v373, 62
      %v540 = vsel %vm539, 1, 0
      %vm541 = vcmp.eq.s32.totalorder %v540, 1
      %v542 = vsel %vm541, %v536, 0.0
      %v543 = vsel %vm541, %v538, 0.0
      %v544 = vpack.c.bf16 %v534, %v533
      %v545 = vpack.c.bf16 %v525, %v524
      %v546 = vpack.c.bf16 %v543, %v542
      %s547 = scalar_lea.vmem %s4, 8
      %v548 = vld [vmem:[%s547] sm:$0xf]
      %v549 = vld [vmem:[%s547 + $0x4] sm:$0xf]
      %s550 = scalar_lea.vmem %s5, 16
      %v551 = vld [vmem:[%s550] sm:$0xff]
      %v552 = vld [vmem:[%s550 + $0x8] sm:$0xff]
      %554 = vset.pattern.permute.xlu0 0
      %555 = vperm.xlu0 %554, %v551
      %v556 = vpop.permute.xlu0 %555
      %559 = vset.pattern.permute.xlu0 0
      %560 = vperm.xlu0 %559, %v552
      %v561 = vpop.permute.xlu0 %560
      %v565 = vunpack.c.l.b16 %v548
      %v566 = vunpack.c.l.b16 %v549
      %v567 = vpack.c.b16 %v566, %v565
      %v569 = vsel %vm461, %v567, 0
      %571 = vmatpush.bf16.msra.mxu0 0
      %572 = vmatpush.bf16.msra.mxu0 0
      %573 = vmatpush.bf16.msra.mxu0 0
      %574 = vmatpush.bf16.msra.mxu0 0
      %575 = vmatpush.bf16.msra.mxu0 0
      %576 = vmatpush.bf16.msra.mxu0 %v546
      %577 = vmatpush.bf16.msra.mxu0 %v545
      %578 = vmatpush.bf16.msra.mxu0 %v544
      %579 = vmatmul.bf16.gmra.mxu0 %v569
      %v580 = vpop.f32.mrf.mxu0
      %v581 = vadd.f32 %v556, %v580
      %v582 = vpop.f32.mrf.mxu0
      %v583 = vadd.f32 %v561, %v582
      %584 = vdwg.mxu0
      %v585 = vmax.f32 %v581, 0.0
      %v586 = vmax.f32 %v583, 0.0
      %s587 = scalar_lea.vmem %s6, 8
      %v588 = vld [vmem:[%s587] sm:$0xf]
      %v589 = vld [vmem:[%s587 + $0x4] sm:$0xf]
      %v590 = vpack.c.bf16 %v586, %v585
      %s591 = scalar_lea.vmem %s7, 16
      %v592 = vld [vmem:[%s591] sm:$0xff]
      %v593 = vld [vmem:[%s591 + $0x8] sm:$0xff]
      %595 = vset.pattern.permute.xlu0 0
      %596 = vperm.xlu0 %595, %v592
      %v597 = vpop.permute.xlu0 %596
      %600 = vset.pattern.permute.xlu0 0
      %601 = vperm.xlu0 %600, %v593
      %v602 = vpop.permute.xlu0 %601
      %v606 = vunpack.c.l.b16 %v588
      %v607 = vunpack.c.l.b16 %v589
      %v608 = vpack.c.b16 %v607, %v606
      %v610 = vsel %vm501, %v608, 0
      %612 = vmatpush.bf16.msra.mxu0 0
      %613 = vmatpush.bf16.msra.mxu0 0
      %614 = vmatpush.bf16.msra.mxu0 0
      %615 = vmatpush.bf16.msra.mxu0 0
      %616 = vmatpush.bf16.msra.mxu0 0
      %617 = vmatpush.bf16.msra.mxu0 0
      %618 = vmatpush.bf16.msra.mxu0 0
      %619 = vmatpush.bf16.msra.mxu0 %v590
      %620 = vmatmul.bf16.gmra.mxu0 %v610
      %v621 = vpop.f32.mrf.mxu0
      %v622 = vadd.f32 %v597, %v621
      %v623 = vpop.f32.mrf.mxu0
      %v624 = vadd.f32 %v602, %v623
      %625 = vdwg.mxu0
      %v626 = vadd.f32 %v524, %v622
      %v627 = vadd.f32 %v525, %v624
      %v628 = vmul.f32 %v626, %v522
      %v629 = vmul.f32 %v627, %v522
      %630 = vrot.lane.b32.xlu0 %v628, 4
      %v631 = vpop.permute.xlu0 %630
      %632 = vrot.lane.b32.xlu0 %v629, 4
      %v633 = vpop.permute.xlu0 %632
      %vm634 = vcmp.ge.s32.totalorder %v373, 4
      %v635 = vsel %vm634, 1, 0
      %vm636 = vcmp.eq.s32.totalorder %v635, 1
      %v637 = vsel %vm636, %v631, 0.0
      %v638 = vsel %vm636, %v633, 0.0
      %639 = vrot.lane.b32.xlu0 %v628, 124
      %v640 = vpop.permute.xlu0 %639
      %641 = vrot.lane.b32.xlu0 %v629, 124
      %v642 = vpop.permute.xlu0 %641
      %vm643 = vcmp.lt.s32.totalorder %v373, 60
      %v644 = vsel %vm643, 1, 0
      %vm645 = vcmp.eq.s32.totalorder %v644, 1
      %v646 = vsel %vm645, %v640, 0.0
      %v647 = vsel %vm645, %v642, 0.0
      %v648 = vpack.c.bf16 %v638, %v637
      %v649 = vpack.c.bf16 %v629, %v628
      %v650 = vpack.c.bf16 %v647, %v646
      %s651 = scalar_lea.vmem %s4, 16
      %v652 = vld [vmem:[%s651] sm:$0xf]
      %v653 = vld [vmem:[%s651 + $0x4] sm:$0xf]
      %s654 = scalar_lea.vmem %s5, 32
      %v655 = vld [vmem:[%s654] sm:$0xff]
      %v656 = vld [vmem:[%s654 + $0x8] sm:$0xff]
      %658 = vset.pattern.permute.xlu0 0
      %659 = vperm.xlu0 %658, %v655
      %v660 = vpop.permute.xlu0 %659
      %663 = vset.pattern.permute.xlu0 0
      %664 = vperm.xlu0 %663, %v656
      %v665 = vpop.permute.xlu0 %664
      %v669 = vunpack.c.l.b16 %v652
      %v670 = vunpack.c.l.b16 %v653
      %v671 = vpack.c.b16 %v670, %v669
      %v673 = vsel %vm461, %v671, 0
      %675 = vmatpush.bf16.msra.mxu0 0
      %676 = vmatpush.bf16.msra.mxu0 0
      %677 = vmatpush.bf16.msra.mxu0 0
      %678 = vmatpush.bf16.msra.mxu0 0
      %679 = vmatpush.bf16.msra.mxu0 0
      %680 = vmatpush.bf16.msra.mxu0 %v650
      %681 = vmatpush.bf16.msra.mxu0 %v649
      %682 = vmatpush.bf16.msra.mxu0 %v648
      %683 = vmatmul.bf16.gmra.mxu0 %v673
      %v684 = vpop.f32.mrf.mxu0
      %v685 = vadd.f32 %v660, %v684
      %v686 = vpop.f32.mrf.mxu0
      %v687 = vadd.f32 %v665, %v686
      %688 = vdwg.mxu0
      %v689 = vmax.f32 %v685, 0.0
      %v690 = vmax.f32 %v687, 0.0
      %s691 = scalar_lea.vmem %s6, 16
      %v692 = vld [vmem:[%s691] sm:$0xf]
      %v693 = vld [vmem:[%s691 + $0x4] sm:$0xf]
      %v694 = vpack.c.bf16 %v690, %v689
      %s695 = scalar_lea.vmem %s7, 32
      %v696 = vld [vmem:[%s695] sm:$0xff]
      %v697 = vld [vmem:[%s695 + $0x8] sm:$0xff]
      %699 = vset.pattern.permute.xlu0 0
      %700 = vperm.xlu0 %699, %v696
      %v701 = vpop.permute.xlu0 %700
      %704 = vset.pattern.permute.xlu0 0
      %705 = vperm.xlu0 %704, %v697
      %v706 = vpop.permute.xlu0 %705
      %v710 = vunpack.c.l.b16 %v692
      %v711 = vunpack.c.l.b16 %v693
      %v712 = vpack.c.b16 %v711, %v710
      %v714 = vsel %vm501, %v712, 0
      %716 = vmatpush.bf16.msra.mxu0 0
      %717 = vmatpush.bf16.msra.mxu0 0
      %718 = vmatpush.bf16.msra.mxu0 0
      %719 = vmatpush.bf16.msra.mxu0 0
      %720 = vmatpush.bf16.msra.mxu0 0
      %721 = vmatpush.bf16.msra.mxu0 0
      %722 = vmatpush.bf16.msra.mxu0 0
      %723 = vmatpush.bf16.msra.mxu0 %v694
      %724 = vmatmul.bf16.gmra.mxu0 %v714
      %v725 = vpop.f32.mrf.mxu0
      %v726 = vadd.f32 %v701, %v725
      %v727 = vpop.f32.mrf.mxu0
      %v728 = vadd.f32 %v706, %v727
      %729 = vdwg.mxu0
      %v730 = vadd.f32 %v628, %v726
      %v731 = vadd.f32 %v629, %v728
      %v732 = vmul.f32 %v730, %v522
      %v733 = vmul.f32 %v731, %v522
      %734 = vrot.lane.b32.xlu0 %v732, 8
      %v735 = vpop.permute.xlu0 %734
      %736 = vrot.lane.b32.xlu0 %v733, 8
      %v737 = vpop.permute.xlu0 %736
      %vm738 = vcmp.ge.s32.totalorder %v373, 8
      %v739 = vsel %vm738, 1, 0
      %vm740 = vcmp.eq.s32.totalorder %v739, 1
      %v741 = vsel %vm740, %v735, 0.0
      %v742 = vsel %vm740, %v737, 0.0
      %743 = vrot.lane.b32.xlu0 %v732, 120
      %v744 = vpop.permute.xlu0 %743
      %745 = vrot.lane.b32.xlu0 %v733, 120
      %v746 = vpop.permute.xlu0 %745
      %vm747 = vcmp.lt.s32.totalorder %v373, 56
      %v748 = vsel %vm747, 1, 0
      %vm749 = vcmp.eq.s32.totalorder %v748, 1
      %v750 = vsel %vm749, %v744, 0.0
      %v751 = vsel %vm749, %v746, 0.0
      %v752 = vpack.c.bf16 %v742, %v741
      %v753 = vpack.c.bf16 %v733, %v732
      %v754 = vpack.c.bf16 %v751, %v750
      %s755 = scalar_lea.vmem %s4, 24
      %v756 = vld [vmem:[%s755] sm:$0xf]
      %v757 = vld [vmem:[%s755 + $0x4] sm:$0xf]
      %s758 = scalar_lea.vmem %s5, 48
      %v759 = vld [vmem:[%s758] sm:$0xff]
      %v760 = vld [vmem:[%s758 + $0x8] sm:$0xff]
      %762 = vset.pattern.permute.xlu0 0
      %763 = vperm.xlu0 %762, %v759
      %v764 = vpop.permute.xlu0 %763
      %767 = vset.pattern.permute.xlu0 0
      %768 = vperm.xlu0 %767, %v760
      %v769 = vpop.permute.xlu0 %768
      %v773 = vunpack.c.l.b16 %v756
      %v774 = vunpack.c.l.b16 %v757
      %v775 = vpack.c.b16 %v774, %v773
      %v777 = vsel %vm461, %v775, 0
      %779 = vmatpush.bf16.msra.mxu0 0
      %780 = vmatpush.bf16.msra.mxu0 0
      %781 = vmatpush.bf16.msra.mxu0 0
      %782 = vmatpush.bf16.msra.mxu0 0
      %783 = vmatpush.bf16.msra.mxu0 0
      %784 = vmatpush.bf16.msra.mxu0 %v754
      %785 = vmatpush.bf16.msra.mxu0 %v753
      %786 = vmatpush.bf16.msra.mxu0 %v752
      %787 = vmatmul.bf16.gmra.mxu0 %v777
      %v788 = vpop.f32.mrf.mxu0
      %v789 = vadd.f32 %v764, %v788
      %v790 = vpop.f32.mrf.mxu0
      %v791 = vadd.f32 %v769, %v790
      %792 = vdwg.mxu0
      %v793 = vmax.f32 %v789, 0.0
      %v794 = vmax.f32 %v791, 0.0
      %s795 = scalar_lea.vmem %s6, 24
      %v796 = vld [vmem:[%s795] sm:$0xf]
      %v797 = vld [vmem:[%s795 + $0x4] sm:$0xf]
      %v798 = vpack.c.bf16 %v794, %v793
      %s799 = scalar_lea.vmem %s7, 48
      %v800 = vld [vmem:[%s799] sm:$0xff]
      %v801 = vld [vmem:[%s799 + $0x8] sm:$0xff]
      %803 = vset.pattern.permute.xlu0 0
      %804 = vperm.xlu0 %803, %v800
      %v805 = vpop.permute.xlu0 %804
      %808 = vset.pattern.permute.xlu0 0
      %809 = vperm.xlu0 %808, %v801
      %v810 = vpop.permute.xlu0 %809
      %v814 = vunpack.c.l.b16 %v796
      %v815 = vunpack.c.l.b16 %v797
      %v816 = vpack.c.b16 %v815, %v814
      %v818 = vsel %vm501, %v816, 0
      %820 = vmatpush.bf16.msra.mxu0 0
      %821 = vmatpush.bf16.msra.mxu0 0
      %822 = vmatpush.bf16.msra.mxu0 0
      %823 = vmatpush.bf16.msra.mxu0 0
      %824 = vmatpush.bf16.msra.mxu0 0
      %825 = vmatpush.bf16.msra.mxu0 0
      %826 = vmatpush.bf16.msra.mxu0 0
      %827 = vmatpush.bf16.msra.mxu0 %v798
      %828 = vmatmul.bf16.gmra.mxu0 %v818
      %v829 = vpop.f32.mrf.mxu0
      %v830 = vadd.f32 %v805, %v829
      %v831 = vpop.f32.mrf.mxu0
      %v832 = vadd.f32 %v810, %v831
      %833 = vdwg.mxu0
      %v834 = vadd.f32 %v732, %v830
      %v835 = vadd.f32 %v733, %v832
      %v836 = vmul.f32 %v834, %v522
      %v837 = vmul.f32 %v835, %v522
      %v838 = vld [vmem:[%s8] sm:$0x7]
      %v839 = vpack.c.bf16 %v837, %v836
      %v840 = vld [vmem:[%s9] sm:$0x1f]
      %842 = vset.pattern.permute.xlu0 0
      %843 = vperm.xlu0 %842, %v840
      %v844 = vpop.permute.xlu0 %843
      %v847 = vsel %vm501, %v838, 0
      %849 = vmatpush.bf16.msra.mxu0 0
      %850 = vmatpush.bf16.msra.mxu0 0
      %851 = vmatpush.bf16.msra.mxu0 0
      %852 = vmatpush.bf16.msra.mxu0 0
      %853 = vmatpush.bf16.msra.mxu0 0
      %854 = vmatpush.bf16.msra.mxu0 0
      %855 = vmatpush.bf16.msra.mxu0 0
      %856 = vmatpush.bf16.msra.mxu0 %v839
      %857 = vmatmul.bf16.gmra.mxu0 %v847
      %v858 = vpop.f32.mrf.mxu0
      %v859 = vadd.f32 %v844, %v858
      %v860 = vpop.f32.mrf.mxu0
      %861 = vdwg.mxu0
      %v862 = vmul.f32 %v859, %v522
      %863 = vst [vmem:[%s368] sm:$0x1f] %v862
      %p864 = scmp.lt.s32.totalorder %s21, 1
      %s865 = scalar_select %p864, %s21, 1
      %s866 = smul.addr %s865, 8
      %s867 = scalar_lea.vmem %s10, %s866
      // Predicated region
      $region61: #{single_stage_forward.1} parent=59 // pred_check
        %p868 = pneg %p259
      $region62: #{single_stage_forward.1} parent=59 // pred_check_branch
        %870 = sbr.rel (%p868) target = $region64
      $region63: #{single_stage_forward.1} parent=59 // pred_region
        _
      $region64: #{single_stage_forward.1} parent=59 // pred_fallthru
        _
    $region60: #{single_stage_forward.1} parent=5 // pred_fallthru
      _
    %p871 = scmp.le.s32.totalorder 2, %s16
    // Predicated region
    $region65: #{single_stage_forward.1} parent=5 // pred_check
      %p872 = pneg %p871
    $region66: #{single_stage_forward.1} parent=5 // pred_check_branch
      %874 = sbr.rel (%p872) target = $region68
    $region67: #{single_stage_forward.1} parent=5 // pred_region
      %s875 = ssub.s32 %s16, 2
      // Predicated region
      $region69: #{single_stage_forward.1} parent=67 // pred_check
        %p876 = pneg %p265
      $region70: #{single_stage_forward.1} parent=67 // pred_check_branch
        %878 = sbr.rel (%p876) target = $region72
      $region71: #{single_stage_forward.1} parent=67 // pred_region
        %p879 = scmp.lt.s32.totalorder %s22, 1
        %s880 = scalar_select %p879, %s22, 1
        %s881 = smul.addr %s880, 8
        %s882 = scalar_lea.vmem %s10, %s881
      $region72: #{single_stage_forward.1} parent=67 // pred_fallthru
        _
    $region68: #{single_stage_forward.1} parent=5 // pred_fallthru
      _
  $region6: #{single_stage_forward.1} parent=0 // loop_footer
    %s20 = sadd.s32 1, %s16
  $region7: #{single_stage_forward.1} parent=0 // loop_footer_branch
    %15 = sbr.rel target = $region3
  $region8: #{single_stage_forward.1} parent=0 // loop_exit
    _

</llo_original>
